<compile_context>
chip_gen: v5e
topology: v5e:2x2
jax: 0.10.0
libtpu: 0.0.40
codegen_flags: <defaults>
</compile_context>

<pallas_src>
import jax
import jax.numpy as jnp
from jax.experimental import pallas as pl
from jax.experimental.pallas import tpu as pltpu

IN_FEATURES = 512
OUT_FEATURES = 5
N_PAD = 128          # lane-dense output width (multiple of 128)
TM_MAX = 4096        # max batch tile (f32: 2 x 8 MiB x-tile + 2 x 2 MiB out)


def _round_up(x, m):
    return ((x + m - 1) // m) * m


def _fc_kernel(x_ref, w_ref, b_ref, o_ref):
    # One (tm, 512) x-tile per grid step; weight/bias resident across the grid.
    # MXU matmul with f32 accumulation, bias broadcast-add, lane-dense store.
    acc = jnp.dot(x_ref[...], w_ref[...], preferred_element_type=jnp.float32)
    o_ref[...] = (acc + b_ref[...]).astype(o_ref.dtype)


def prepare_params(w, b):
    """One-time glue: PyTorch-layout weight [5, 512] / bias [5] ->
    transposed + lane-padded [512, 128] weight and [1, 128] f32 bias."""
    w_t = w.T                                              # [512, 5]
    w_pad = jnp.zeros((IN_FEATURES, N_PAD), w.dtype).at[:, :OUT_FEATURES].set(w_t)
    b_pad = jnp.zeros((1, N_PAD), jnp.float32).at[0, :OUT_FEATURES].set(
        b.astype(jnp.float32))
    return w_pad, b_pad


def final_block_forward_padded(x, w_pad, b_pad):
    """x: [B, 512], w_pad: [512, 128], b_pad: [1, 128] -> [B, 128].
    Columns >= 5 are exactly zero; slice lazily at the consumer."""
    B, K = x.shape
    assert K == IN_FEATURES

    # Batch tile: multiple of 8 (f32 sublane), capped for VMEM, and split in
    # two for large B so the "parallel" batch axis feeds both v7x TCs.
    tm = min(TM_MAX, max(8, _round_up((B + 1) // 2, 8)))
    grid = (pl.cdiv(B, tm),)   # ragged last tile handled by Pallas masking

    xb = jnp.dtype(x.dtype).itemsize
    wb = jnp.dtype(w_pad.dtype).itemsize
    cost = pl.CostEstimate(
        flops=2 * B * K * N_PAD,
        transcendentals=0,
        bytes_accessed=B * K * xb + B * N_PAD * xb + K * N_PAD * wb + N_PAD * 4,
    )

    return pl.pallas_call(
        _fc_kernel,
        out_shape=jax.ShapeDtypeStruct((B, N_PAD), x.dtype),
        grid=grid,
        in_specs=[
            pl.BlockSpec((tm, K), lambda i: (i, 0)),        # x tile (pipelined)
            pl.BlockSpec((K, N_PAD), lambda i: (0, 0)),     # weight (resident)
            pl.BlockSpec((1, N_PAD), lambda i: (0, 0)),     # bias (resident)
        ],
        out_specs=pl.BlockSpec((tm, N_PAD), lambda i: (i, 0)),
        compiler_params=pltpu.CompilerParams(
            dimension_semantics=("parallel",),
            vmem_limit_bytes=32 << 20,
        ),
        cost_estimate=cost,
    )(x, w_pad, b_pad)


def final_block_forward(x, w_pad, b_pad):
    """Exact nn.Linear(512, 5) semantics: [B, 512] -> [B, 5]."""
    return final_block_forward_padded(x, w_pad, b_pad)[:, :OUT_FEATURES]


def init_params(key, in_features=IN_FEATURES, out_features=OUT_FEATURES,
                dtype=jnp.float32):
    # Deterministic init mimicking PyTorch's nn.Linear default:
    # U(-1/sqrt(in_features), 1/sqrt(in_features)) for weight and bias.
    kw, kb = jax.random.split(key)
    bound = 1.0 / jnp.sqrt(jnp.array(in_features, dtype=jnp.float32))
    w = jax.random.uniform(kw, (out_features, in_features), dtype, -bound, bound)
    b = jax.random.uniform(kb, (out_features,), dtype, -bound, bound)
    return w, b


if __name__ == "__main__":
    key = jax.random.PRNGKey(0)
    kx, kp, kx2 = jax.random.split(key, 3)

    w, b = init_params(kp)
    # Pre-transpose / pre-pad the params once (not per forward call).
    w_pad, b_pad = prepare_params(w, b)

    # Small case (B=2): single partial tile.
    B = 2
    x = jax.random.normal(kx, (B, IN_FEATURES), dtype=jnp.float32)
    out = jax.block_until_ready(final_block_forward(x, w_pad, b_pad))
    ref = x @ w.T + b
    assert out.shape == (B, OUT_FEATURES)
    assert jnp.allclose(out, ref, atol=1e-5, rtol=1e-5)

    # Ragged multi-tile case (B=20, tm=16 -> 2 grid steps, partial tail tile).
    B2 = 20
    x2 = jax.random.normal(kx2, (B2, IN_FEATURES), dtype=jnp.float32)
    out2 = jax.block_until_ready(final_block_forward(x2, w_pad, b_pad))
    ref2 = x2 @ w.T + b
    assert out2.shape == (B2, OUT_FEATURES)
    assert jnp.allclose(out2, ref2, atol=1e-5, rtol=1e-5)

    print("KERNEL_OK")
</pallas_src>

<mosaic_0001>
module attributes {stable_mosaic.version = 11 : i64} {
  func.func @_fc_kernel(%arg0: i32, %arg1: memref<8x512xf32, #tpu.memory_space<vmem>>, %arg2: memref<512x128xf32, #tpu.memory_space<vmem>>, %arg3: memref<1x128xf32, #tpu.memory_space<vmem>>, %arg4: memref<8x128xf32, #tpu.memory_space<vmem>>) attributes {dimension_semantics = [#tpu.dimension_semantics<parallel>], iteration_bounds = array<i64: 1>, scalar_prefetch = 0 : i64, scratch_operands = 0 : i64, tpu.core_type = #tpu.core_type<tc>, window_params = [{transform_indices = @transform_0, window_bounds = array<i64: 8, 512>}, {pipeline_mode = #tpu.pipeline_mode<synchronous>, transform_indices = @transform_1, window_bounds = array<i64: 512, 128>}, {pipeline_mode = #tpu.pipeline_mode<synchronous>, transform_indices = @transform_2, window_bounds = array<i64: 1, 128>}, {transform_indices = @transform_3, window_bounds = array<i64: 8, 128>}]} {
    %c0 = arith.constant 0 : index
    %c0_0 = arith.constant 0 : index
    %0 = vector.load %arg1[%c0, %c0_0] : memref<8x512xf32, #tpu.memory_space<vmem>>, vector<8x512xf32>
    %c0_1 = arith.constant 0 : index
    %c0_2 = arith.constant 0 : index
    %1 = vector.load %arg2[%c0_1, %c0_2] : memref<512x128xf32, #tpu.memory_space<vmem>>, vector<512x128xf32>
    %cst = arith.constant dense<0.000000e+00> : vector<8x128xf32>
    %2 = tpu.matmul %0, %1, %cst {dimension_numbers = #tpu.dot_dimension_numbers<[1], [0], [0], [1], [0, 0, 1, 1], [], []>} : vector<8x512xf32>, vector<512x128xf32>, vector<8x128xf32> -> vector<8x128xf32>
    %c0_3 = arith.constant 0 : index
    %c0_4 = arith.constant 0 : index
    %3 = vector.load %arg3[%c0_3, %c0_4] : memref<1x128xf32, #tpu.memory_space<vmem>>, vector<1x128xf32>
    %4 = vector.broadcast %3 : vector<1x128xf32> to vector<8x128xf32>
    %5 = arith.addf %2, %4 : vector<8x128xf32>
    %c0_5 = arith.constant 0 : index
    %c0_6 = arith.constant 0 : index
    %6 = vector.load %arg4[%c0_5, %c0_6] : memref<8x128xf32, #tpu.memory_space<vmem>>, vector<8x128xf32>
    tpu.vector_store %arg4[%c0_5, %c0_6], %5 {strides = array<i32>} : memref<8x128xf32, #tpu.memory_space<vmem>>, vector<8x128xf32>,
    return
  }
  func.func @transform_0(%arg0: i32) -> (i32, i32) {
    %c0_i32 = arith.constant 0 : i32
    %c0_i32_0 = arith.constant 0 : i32
    return %arg0, %c0_i32 : i32, i32
  }
  func.func @transform_1(%arg0: i32) -> (i32, i32) {
    %c0_i32 = arith.constant 0 : i32
    %c0_i32_0 = arith.constant 0 : i32
    %c0_i32_1 = arith.constant 0 : i32
    return %c0_i32, %c0_i32_0 : i32, i32
  }
  func.func @transform_2(%arg0: i32) -> (i32, i32) {
    %c0_i32 = arith.constant 0 : i32
    %c0_i32_0 = arith.constant 0 : i32
    %c0_i32_1 = arith.constant 0 : i32
    return %c0_i32, %c0_i32_0 : i32, i32
  }
  func.func @transform_3(%arg0: i32) -> (i32, i32) {
    %c0_i32 = arith.constant 0 : i32
    %c0_i32_0 = arith.constant 0 : i32
    return %arg0, %c0_i32 : i32, i32
  }
}

</mosaic_0001>

<llo_original>
// kernel: tpu_custom_call.1
$region0: #{tpu_custom_call.1}
  #allocation0 [shape = 'u32[]', space=smem, size = 0x4, offset = 0x4, fixed_abs, tag = 'smem constant byte address 0x4 - core index']
  #allocation1 [shape = 'u32[72,128]{1,0:T(1,128)}', space=vmem, size = 0x9000, scoped, tag = 'internal scratch']
  %s0 = inlined_call_operand.hbm [shape: f32[2,512], index: 0, kind: input, shape index: {}]
  %s1 = inlined_call_operand.hbm [shape: f32[512,128], index: 1, kind: input, shape index: {}]
  %s2 = inlined_call_operand.vmem [shape: f32[1,128], index: 2, kind: input, shape index: {}]
  %s3 = inlined_call_operand.hbm [shape: f32[2,128], index: 3, kind: output, shape index: {}]
  %s4 = sld [smem:[#allocation0]]
  $region30: #{tpu_custom_call.1} parent=0
    _
  %s6 = ssub.s32 1, %s4
  %s7 = scalar_select 0, %s6, %s4
  $region1: #{tpu_custom_call.1} parent=0
    #allocation2 [shape = 'u8[16384]{0}', space=vmem, size = 0x4000, scoped, tag = 'input window, operand 0, single buffered']
    #allocation3 [shape = 's32[1]{0}', space=sflag, size = 0x4, scoped, tag = 'scoped memory for tpu_custom_call.1']
    #allocation4 [shape = 's32[1]{0}', space=sflag, size = 0x4, scoped, tag = 'scoped memory for tpu_custom_call.1']
    #allocation5 [shape = 'u8[262144]{0}', space=vmem, size = 0x40000, scoped, tag = 'input window, operand 1, single buffered']
    #allocation6 [shape = 's32[1]{0}', space=sflag, size = 0x4, scoped, tag = 'scoped memory for tpu_custom_call.1']
    #allocation7 [shape = 'u8[4096]{0}', space=vmem, size = 0x1000, scoped, tag = 'output window, operand 0, single buffered']
    %8 = vsyncpa [#allocation3], 0
    %9 = vsyncpa [#allocation6], 0
    %10 = vsyncpa [#allocation4], 0
    // Predicated region
    $region2: #{tpu_custom_call.1} parent=1 // pred_check
      _
    $region3: #{tpu_custom_call.1} parent=1 // pred_check_branch
      %12 = sbr.rel (0) target = $region5
    $region4: #{tpu_custom_call.1} parent=1 // pred_region
      %14 = vsyncadd [#allocation3], 384
      %s15 = sshll.u32 %s0, 4
      %s16 = int_to_ptr.hbm [resolvable:$true] %s15
      %s17 = sshll.u32 [#allocation2], 4
      %s18 = int_to_ptr.vmem [resolvable:$true] %s17
      %23 = dma.hbm_to_vmem [thread:$0]  %s16, 128, %s18, [#allocation3], 128, 128, 8
    $region5: #{tpu_custom_call.1} parent=1 // pred_fallthru
      _
    // Predicated region
    $region6: #{tpu_custom_call.1} parent=1 // pred_check
      _
    $region7: #{tpu_custom_call.1} parent=1 // pred_check_branch
      %25 = sbr.rel (0) target = $region9
    $region8: #{tpu_custom_call.1} parent=1 // pred_region
      %27 = vsyncadd [#allocation6], 0
      %s28 = sshll.u32 %s1, 4
      %s29 = int_to_ptr.hbm [resolvable:$true] %s28
      %s30 = sshll.u32 [#allocation5], 4
      %s31 = int_to_ptr.vmem [resolvable:$true] %s30
      %36 = dma.hbm_to_vmem [thread:$0]  %s29, 8192, %s31, [#allocation6], 128, 128, 8
    $region9: #{tpu_custom_call.1} parent=1 // pred_fallthru
      _
    // Predicated region
    $region10: #{tpu_custom_call.1} parent=1 // pred_check
      _
    $region11: #{tpu_custom_call.1} parent=1 // pred_check_branch
      %38 = sbr.rel (0) target = $region13
    $region12: #{tpu_custom_call.1} parent=1 // pred_region
      _
    $region13: #{tpu_custom_call.1} parent=1 // pred_fallthru
      _
    // Predicated region
    $region14: #{tpu_custom_call.1} parent=1 // pred_check
      _
    $region15: #{tpu_custom_call.1} parent=1 // pred_check_branch
      %40 = sbr.rel (0) target = $region17
    $region16: #{tpu_custom_call.1} parent=1 // pred_region
      %42 = dma.done [#allocation3], 512
    $region17: #{tpu_custom_call.1} parent=1 // pred_fallthru
      _
    // Predicated region
    $region18: #{tpu_custom_call.1} parent=1 // pred_check
      _
    $region19: #{tpu_custom_call.1} parent=1 // pred_check_branch
      %44 = sbr.rel (0) target = $region21
    $region20: #{tpu_custom_call.1} parent=1 // pred_region
      %46 = dma.done [#allocation6], 8192
    $region21: #{tpu_custom_call.1} parent=1 // pred_fallthru
      _
    %v47 = vld [vmem:[#allocation2] sm:$0xff]
    %v48 = vld [vmem:[#allocation2 + $0x8] sm:$0xff]
    %v49 = vld [vmem:[#allocation2 + $0x10] sm:$0xff]
    %v50 = vld [vmem:[#allocation2 + $0x18] sm:$0xff]
    %v51 = vld [vmem:[#allocation5] sm:$0xff]
    %v52 = vld [vmem:[#allocation5 + $0x8] sm:$0xff]
    %v53 = vld [vmem:[#allocation5 + $0x10] sm:$0xff]
    %v54 = vld [vmem:[#allocation5 + $0x18] sm:$0xff]
    %v55 = vld [vmem:[#allocation5 + $0x20] sm:$0xff]
    %v56 = vld [vmem:[#allocation5 + $0x28] sm:$0xff]
    %v57 = vld [vmem:[#allocation5 + $0x30] sm:$0xff]
    %v58 = vld [vmem:[#allocation5 + $0x38] sm:$0xff]
    %v59 = vld [vmem:[#allocation5 + $0x40] sm:$0xff]
    %v60 = vld [vmem:[#allocation5 + $0x48] sm:$0xff]
    %v61 = vld [vmem:[#allocation5 + $0x50] sm:$0xff]
    %v62 = vld [vmem:[#allocation5 + $0x58] sm:$0xff]
    %v63 = vld [vmem:[#allocation5 + $0x60] sm:$0xff]
    %v64 = vld [vmem:[#allocation5 + $0x68] sm:$0xff]
    %v65 = vld [vmem:[#allocation5 + $0x70] sm:$0xff]
    %v66 = vld [vmem:[#allocation5 + $0x78] sm:$0xff]
    %v67 = vld [vmem:[#allocation5 + $0x80] sm:$0xff]
    %v68 = vld [vmem:[#allocation5 + $0x88] sm:$0xff]
    %v69 = vld [vmem:[#allocation5 + $0x90] sm:$0xff]
    %v70 = vld [vmem:[#allocation5 + $0x98] sm:$0xff]
    %v71 = vld [vmem:[#allocation5 + $0xa0] sm:$0xff]
    %v72 = vld [vmem:[#allocation5 + $0xa8] sm:$0xff]
    %v73 = vld [vmem:[#allocation5 + $0xb0] sm:$0xff]
    %v74 = vld [vmem:[#allocation5 + $0xb8] sm:$0xff]
    %v75 = vld [vmem:[#allocation5 + $0xc0] sm:$0xff]
    %v76 = vld [vmem:[#allocation5 + $0xc8] sm:$0xff]
    %v77 = vld [vmem:[#allocation5 + $0xd0] sm:$0xff]
    %v78 = vld [vmem:[#allocation5 + $0xd8] sm:$0xff]
    %v79 = vld [vmem:[#allocation5 + $0xe0] sm:$0xff]
    %v80 = vld [vmem:[#allocation5 + $0xe8] sm:$0xff]
    %v81 = vld [vmem:[#allocation5 + $0xf0] sm:$0xff]
    %v82 = vld [vmem:[#allocation5 + $0xf8] sm:$0xff]
    %v83 = vld [vmem:[#allocation5 + $0x100] sm:$0xff]
    %v84 = vld [vmem:[#allocation5 + $0x108] sm:$0xff]
    %v85 = vld [vmem:[#allocation5 + $0x110] sm:$0xff]
    %v86 = vld [vmem:[#allocation5 + $0x118] sm:$0xff]
    %v87 = vld [vmem:[#allocation5 + $0x120] sm:$0xff]
    %v88 = vld [vmem:[#allocation5 + $0x128] sm:$0xff]
    %v89 = vld [vmem:[#allocation5 + $0x130] sm:$0xff]
    %v90 = vld [vmem:[#allocation5 + $0x138] sm:$0xff]
    %v91 = vld [vmem:[#allocation5 + $0x140] sm:$0xff]
    %v92 = vld [vmem:[#allocation5 + $0x148] sm:$0xff]
    %v93 = vld [vmem:[#allocation5 + $0x150] sm:$0xff]
    %v94 = vld [vmem:[#allocation5 + $0x158] sm:$0xff]
    %v95 = vld [vmem:[#allocation5 + $0x160] sm:$0xff]
    %v96 = vld [vmem:[#allocation5 + $0x168] sm:$0xff]
    %v97 = vld [vmem:[#allocation5 + $0x170] sm:$0xff]
    %v98 = vld [vmem:[#allocation5 + $0x178] sm:$0xff]
    %v99 = vld [vmem:[#allocation5 + $0x180] sm:$0xff]
    %v100 = vld [vmem:[#allocation5 + $0x188] sm:$0xff]
    %v101 = vld [vmem:[#allocation5 + $0x190] sm:$0xff]
    %v102 = vld [vmem:[#allocation5 + $0x198] sm:$0xff]
    %v103 = vld [vmem:[#allocation5 + $0x1a0] sm:$0xff]
    %v104 = vld [vmem:[#allocation5 + $0x1a8] sm:$0xff]
    %v105 = vld [vmem:[#allocation5 + $0x1b0] sm:$0xff]
    %v106 = vld [vmem:[#allocation5 + $0x1b8] sm:$0xff]
    %v107 = vld [vmem:[#allocation5 + $0x1c0] sm:$0xff]
    %v108 = vld [vmem:[#allocation5 + $0x1c8] sm:$0xff]
    %v109 = vld [vmem:[#allocation5 + $0x1d0] sm:$0xff]
    %v110 = vld [vmem:[#allocation5 + $0x1d8] sm:$0xff]
    %v111 = vld [vmem:[#allocation5 + $0x1e0] sm:$0xff]
    %v112 = vld [vmem:[#allocation5 + $0x1e8] sm:$0xff]
    %v113 = vld [vmem:[#allocation5 + $0x1f0] sm:$0xff]
    %v114 = vld [vmem:[#allocation5 + $0x1f8] sm:$0xff]
    %v115 = vld [vmem:[%s2] sm:$0x1]
    %v117 = vperm.slane %v115, 0
    %123 = vst [vmem:[#allocation1] ss:$4 sm:$0xff] %v47
    %s124 = scalar_lea.vmem [#allocation1], 1
    %125 = vst [vmem:[%s124] ss:$4 sm:$0xff] %v48
    %s126 = scalar_lea.vmem [#allocation1], 2
    %127 = vst [vmem:[%s126] ss:$4 sm:$0xff] %v49
    %s128 = scalar_lea.vmem [#allocation1], 3
    %129 = vst [vmem:[%s128] ss:$4 sm:$0xff] %v50
    %v130 = vld.sshfl [vmem:[#allocation1] sm:$0xff pattern:$0x73625140]
    %v131 = vld.sshfl [vmem:[#allocation1 + $0x8] sm:$0xff pattern:$0x73625140]
    %v132 = vld.sshfl [vmem:[#allocation1 + $0x10] sm:$0xff pattern:$0x73625140]
    %v133 = vld.sshfl [vmem:[#allocation1 + $0x18] sm:$0xff pattern:$0x73625140]
    %138 = vmatpush.msra.mxu0 %v66
    %139 = vmatpush.msra.mxu0 %v65
    %140 = vmatpush.msra.mxu0 %v64
    %141 = vmatpush.msra.mxu0 %v63
    %142 = vmatpush.msra.mxu0 %v62
    %143 = vmatpush.msra.mxu0 %v61
    %144 = vmatpush.msra.mxu0 %v60
    %145 = vmatpush.msra.mxu0 %v59
    %146 = vmatpush.msra.mxu0 %v58
    %147 = vmatpush.msra.mxu0 %v57
    %148 = vmatpush.msra.mxu0 %v56
    %149 = vmatpush.msra.mxu0 %v55
    %150 = vmatpush.msra.mxu0 %v54
    %151 = vmatpush.msra.mxu0 %v53
    %152 = vmatpush.msra.mxu0 %v52
    %153 = vmatpush.msra.mxu0 %v51
    %154 = vmatmul.f32.gmra.mxu0 %v130
    %v155 = vpop.f32.mrf.mxu0
    %v156 = vadd.f32 %v117, %v155
    %157 = vdwg.mxu0
    %158 = vmatpush.msra.mxu0 %v82
    %159 = vmatpush.msra.mxu0 %v81
    %160 = vmatpush.msra.mxu0 %v80
    %161 = vmatpush.msra.mxu0 %v79
    %162 = vmatpush.msra.mxu0 %v78
    %163 = vmatpush.msra.mxu0 %v77
    %164 = vmatpush.msra.mxu0 %v76
    %165 = vmatpush.msra.mxu0 %v75
    %166 = vmatpush.msra.mxu0 %v74
    %167 = vmatpush.msra.mxu0 %v73
    %168 = vmatpush.msra.mxu0 %v72
    %169 = vmatpush.msra.mxu0 %v71
    %170 = vmatpush.msra.mxu0 %v70
    %171 = vmatpush.msra.mxu0 %v69
    %172 = vmatpush.msra.mxu0 %v68
    %173 = vmatpush.msra.mxu0 %v67
    %174 = vmatmul.f32.gmra.mxu0 %v131
    %v175 = vpop.f32.mrf.mxu0
    %v176 = vadd.f32 %v156, %v175
    %177 = vdwg.mxu0
    %178 = vmatpush.msra.mxu0 %v98
    %179 = vmatpush.msra.mxu0 %v97
    %180 = vmatpush.msra.mxu0 %v96
    %181 = vmatpush.msra.mxu0 %v95
    %182 = vmatpush.msra.mxu0 %v94
    %183 = vmatpush.msra.mxu0 %v93
    %184 = vmatpush.msra.mxu0 %v92
    %185 = vmatpush.msra.mxu0 %v91
    %186 = vmatpush.msra.mxu0 %v90
    %187 = vmatpush.msra.mxu0 %v89
    %188 = vmatpush.msra.mxu0 %v88
    %189 = vmatpush.msra.mxu0 %v87
    %190 = vmatpush.msra.mxu0 %v86
    %191 = vmatpush.msra.mxu0 %v85
    %192 = vmatpush.msra.mxu0 %v84
    %193 = vmatpush.msra.mxu0 %v83
    %194 = vmatmul.f32.gmra.mxu0 %v132
    %v195 = vpop.f32.mrf.mxu0
    %v196 = vadd.f32 %v176, %v195
    %197 = vdwg.mxu0
    %198 = vmatpush.msra.mxu0 %v114
    %199 = vmatpush.msra.mxu0 %v113
    %200 = vmatpush.msra.mxu0 %v112
    %201 = vmatpush.msra.mxu0 %v111
    %202 = vmatpush.msra.mxu0 %v110
    %203 = vmatpush.msra.mxu0 %v109
    %204 = vmatpush.msra.mxu0 %v108
    %205 = vmatpush.msra.mxu0 %v107
    %206 = vmatpush.msra.mxu0 %v106
    %207 = vmatpush.msra.mxu0 %v105
    %208 = vmatpush.msra.mxu0 %v104
    %209 = vmatpush.msra.mxu0 %v103
    %210 = vmatpush.msra.mxu0 %v102
    %211 = vmatpush.msra.mxu0 %v101
    %212 = vmatpush.msra.mxu0 %v100
    %213 = vmatpush.msra.mxu0 %v99
    %214 = vmatmul.f32.gmra.mxu0 %v133
    %v215 = vpop.f32.mrf.mxu0
    %v216 = vadd.f32 %v196, %v215
    %217 = vdwg.mxu0
    %218 = vst [vmem:[#allocation7] sm:$0xff] %v216
    // Predicated region
    $region22: #{tpu_custom_call.1} parent=1 // pred_check
      _
    $region23: #{tpu_custom_call.1} parent=1 // pred_check_branch
      %220 = sbr.rel (0) target = $region25
    $region24: #{tpu_custom_call.1} parent=1 // pred_region
      %222 = vsyncadd [#allocation4], 96
      %s223 = sshll.u32 [#allocation7], 4
      %s224 = int_to_ptr.vmem [resolvable:$true] %s223
      %s225 = sshll.u32 %s3, 4
      %s226 = int_to_ptr.hbm [resolvable:$true] %s225
      %231 = dma.vmem_to_hbm [thread:$0]  %s224, 32, %s226, [#allocation4], 32, 32, 2
    $region25: #{tpu_custom_call.1} parent=1 // pred_fallthru
      _
    // Predicated region
    $region26: #{tpu_custom_call.1} parent=1 // pred_check
      _
    $region27: #{tpu_custom_call.1} parent=1 // pred_check_branch
      %233 = sbr.rel (0) target = $region29
    $region28: #{tpu_custom_call.1} parent=1 // pred_region
      %235 = dma.done [#allocation4], 128
    $region29: #{tpu_custom_call.1} parent=1 // pred_fallthru
      _
    %236 = vsyncpa [#allocation3], 1
    %237 = vsyncpa [#allocation6], 1
    %238 = vsyncpa [#allocation4], 1

</llo_original>
